<compile_context>
chip_gen: v6e
topology: v6e:2x2x1
jax: 0.10.0
libtpu: 0.0.40
codegen_flags: <defaults>
</compile_context>

<pallas_src>
import functools

import jax
import jax.numpy as jnp
from jax.experimental import pallas as pl
from jax.experimental.pallas import tpu as pltpu

NEG_SLOPE = 0.2


def _round_up(n, m):
    return ((n + m - 1) // m) * m


def ann_kernel(x_ref, w1_ref, b1_ref, w2_ref, b2_ref, w3_ref, b3_ref, o_ref):
    # x tile: (TM, Din_p); cast to bf16 in-kernel (one VPU op, hidden under MXU).
    x = x_ref[...].astype(jnp.bfloat16)

    h = jnp.dot(x, w1_ref[...], preferred_element_type=jnp.float32) + b1_ref[...]
    h = jnp.maximum(h, NEG_SLOPE * h).astype(jnp.bfloat16)   # LeakyReLU(0.2)
    # Dropout(0.2): identity in eval mode.

    h = jnp.dot(h, w2_ref[...], preferred_element_type=jnp.float32) + b2_ref[...]
    h = jnp.maximum(h, NEG_SLOPE * h).astype(jnp.bfloat16)

    out = jnp.dot(h, w3_ref[...], preferred_element_type=jnp.float32) + b3_ref[...]
    o_ref[...] = out.astype(o_ref.dtype)


def prepare_params(params):
    """One-time prep: pad feature dims to multiples of 128, W -> bf16, b -> f32."""
    w1, b1, w2, b2, w3, b3 = params
    din, hid = w1.shape
    dout = w3.shape[1]
    din_p, hid_p, dout_p = (_round_up(d, 128) for d in (din, hid, dout))

    def pad2(a, rows, cols, dtype):
        return jnp.pad(a, ((0, rows - a.shape[0]), (0, cols - a.shape[1]))).astype(dtype)

    return (
        pad2(w1, din_p, hid_p, jnp.bfloat16), pad2(b1, 1, hid_p, jnp.float32),
        pad2(w2, hid_p, hid_p, jnp.bfloat16), pad2(b2, 1, hid_p, jnp.float32),
        pad2(w3, hid_p, dout_p, jnp.bfloat16), pad2(b3, 1, dout_p, jnp.float32),
    )


@functools.partial(jax.jit, static_argnames=("out_features", "tm"))
def ann_forward(x, prepped, *, out_features, tm=512):
    """x: (B, Din) f32. prepped: output of prepare_params. Returns (B, out_features) f32."""
    w1, b1, w2, b2, w3, b3 = prepped
    B, Din = x.shape
    Din_p, H_p = w1.shape
    Dout_p = w3.shape[1]

    B_p = _round_up(B, 8)

    # Batch tile: multiple of 8, <= B_p. Split a single-tile medium batch into
    # two tiles so the "parallel" grid axis can span both v7x TensorCores.
    TM = max(8, (int(tm) // 8) * 8)
    TM = min(TM, B_p)
    if 128 <= B_p <= TM:
        TM = _round_up((B_p + 1) // 2, 8)
    grid = (pl.cdiv(B_p, TM),)  # partial last tile OK; padded rows sliced away

    # Pad x only when actually needed; fold the bf16 cast into that same pass.
    if (B != B_p) or (Din != Din_p):
        x_in = jnp.pad(x, ((0, B_p - B), (0, Din_p - Din))).astype(jnp.bfloat16)
    else:
        x_in = x  # f32 straight from HBM, cast to bf16 inside the kernel
    x_bytes = 2 if x_in.dtype == jnp.bfloat16 else 4

    # VMEM budget: single-buffered resident weights/biases + double-buffered x/out tiles.
    weight_bytes = (Din_p * H_p + H_p * H_p + H_p * Dout_p) * 2
    bias_bytes = (2 * H_p + Dout_p) * 4
    tile_bytes = 2 * TM * Din_p * x_bytes + 2 * TM * Dout_p * 2
    required = weight_bytes + bias_bytes + tile_bytes

    try:
        vmem_cap = int(pltpu.get_tpu_info().vmem_capacity_bytes)
    except Exception:
        vmem_cap = 64 * 1024 * 1024  # conservative (v7x per-TensorCore)
    vmem_limit = min(max(int(required * 1.25) + (8 << 20), 32 << 20),
                     (vmem_cap * 3) // 4)
    if required > vmem_limit:
        # TODO(synk): add a hidden-dim-tiled fallback (grid over H/K with an f32
        # accumulator) for models whose resident bf16 weights exceed per-core
        # VMEM (notably v7x's 64 MiB per TensorCore).
        raise ValueError(
            f"ANN resident buffers ({required / 2**20:.1f} MiB) exceed the VMEM "
            f"budget ({vmem_limit / 2**20:.1f} MiB); hidden size too large for "
            "the all-resident kernel.")

    flops = 2 * B * (Din_p * H_p + H_p * H_p + H_p * Dout_p)
    bytes_accessed = (B_p * Din_p * x_bytes + weight_bytes + bias_bytes
                      + B_p * Dout_p * 2)

    resident = pl.BlockSpec(memory_space=pltpu.MemorySpace.VMEM)

    out_p = pl.pallas_call(
        ann_kernel,
        out_shape=jax.ShapeDtypeStruct((B_p, Dout_p), jnp.bfloat16),
        grid=grid,
        in_specs=[
            pl.BlockSpec((TM, Din_p), lambda i: (i, 0)),  # x: tiled over batch
            resident, resident,   # layer 1 W/b (single-buffered VMEM resident)
            resident, resident,   # layer 2
            resident, resident,   # layer 3
        ],
        out_specs=pl.BlockSpec((TM, Dout_p), lambda i: (i, 0)),
        compiler_params=pltpu.CompilerParams(
            dimension_semantics=("parallel",),
            vmem_limit_bytes=int(vmem_limit),
        ),
        cost_estimate=pl.CostEstimate(
            flops=flops, transcendentals=0, bytes_accessed=bytes_accessed),
    )(x_in, w1, b1, w2, b2, w3, b3)

    return out_p[:B, :out_features].astype(jnp.float32)


def init_params(key, input_size, hidden_size, output_size):
    # Deterministic init mimicking nn.Linear's uniform(-1/sqrt(fan_in), 1/sqrt(fan_in)).
    def linear(k, fan_in, fan_out):
        kw, kb = jax.random.split(k)
        bound = 1.0 / jnp.sqrt(jnp.float32(fan_in))
        w = jax.random.uniform(kw, (fan_in, fan_out), jnp.float32, -bound, bound)
        b = jax.random.uniform(kb, (1, fan_out), jnp.float32, -bound, bound)
        return w, b

    k1, k2, k3 = jax.random.split(key, 3)
    w1, b1 = linear(k1, input_size, hidden_size)
    w2, b2 = linear(k2, hidden_size, hidden_size)
    w3, b3 = linear(k3, hidden_size, output_size)
    return (w1, b1, w2, b2, w3, b3)


def ann_reference(x, params):
    # Pure-f32 reference of the PyTorch forward (eval-mode dropout == identity).
    w1, b1, w2, b2, w3, b3 = params

    def lrelu(v):
        return jnp.maximum(v, NEG_SLOPE * v)

    h1 = lrelu(x @ w1 + b1)
    h2 = lrelu(h1 @ w2 + b2)
    return h2 @ w3 + b3


if __name__ == "__main__":
    input_size, hidden_size, output_size = 32, 64, 8
    batch = 8

    key = jax.random.PRNGKey(0)
    kx, kp = jax.random.split(key)
    x = jax.random.normal(kx, (batch, input_size), jnp.float32)
    params = init_params(kp, input_size, hidden_size, output_size)
    prepped = prepare_params(params)  # one-time pad + bf16 cast (outside hot path)

    out = jax.block_until_ready(ann_forward(x, prepped, out_features=output_size))
    ref = ann_reference(x, params)

    assert out.shape == (batch, output_size)
    # Loose tolerance accounts for bf16 matmul operands / bf16 output store
    # (accumulation stays in f32).
    err = jnp.max(jnp.abs(out - ref))
    assert jnp.allclose(out, ref, atol=5e-2, rtol=5e-2), f"max abs err {err}"

    print("KERNEL_OK")
</pallas_src>

<mosaic_0001>
module attributes {stable_mosaic.version = 11 : i64} {
  func.func @ann_kernel(%arg0: i32, %arg1: memref<8x128xbf16, #tpu.memory_space<vmem>>, %arg2: memref<128x128xbf16, #tpu.memory_space<vmem>>, %arg3: memref<1x128xf32, #tpu.memory_space<vmem>>, %arg4: memref<128x128xbf16, #tpu.memory_space<vmem>>, %arg5: memref<1x128xf32, #tpu.memory_space<vmem>>, %arg6: memref<128x128xbf16, #tpu.memory_space<vmem>>, %arg7: memref<1x128xf32, #tpu.memory_space<vmem>>, %arg8: memref<8x128xbf16, #tpu.memory_space<vmem>>) attributes {dimension_semantics = [#tpu.dimension_semantics<parallel>], iteration_bounds = array<i64: 1>, scalar_prefetch = 0 : i64, scratch_operands = 0 : i64, tpu.core_type = #tpu.core_type<tc>, window_params = [{transform_indices = @transform_0, window_bounds = array<i64: 8, 128>}, {pipeline_mode = #tpu.pipeline_mode<synchronous>, transform_indices = @transform_1, window_bounds = array<i64: 128, 128>}, {pipeline_mode = #tpu.pipeline_mode<synchronous>, transform_indices = @transform_2, window_bounds = array<i64: 1, 128>}, {pipeline_mode = #tpu.pipeline_mode<synchronous>, transform_indices = @transform_3, window_bounds = array<i64: 128, 128>}, {pipeline_mode = #tpu.pipeline_mode<synchronous>, transform_indices = @transform_4, window_bounds = array<i64: 1, 128>}, {pipeline_mode = #tpu.pipeline_mode<synchronous>, transform_indices = @transform_5, window_bounds = array<i64: 128, 128>}, {pipeline_mode = #tpu.pipeline_mode<synchronous>, transform_indices = @transform_6, window_bounds = array<i64: 1, 128>}, {transform_indices = @transform_7, window_bounds = array<i64: 8, 128>}]} {
    %c0 = arith.constant 0 : index
    %c0_0 = arith.constant 0 : index
    %0 = vector.load %arg1[%c0, %c0_0] : memref<8x128xbf16, #tpu.memory_space<vmem>>, vector<8x128xbf16>
    %c0_1 = arith.constant 0 : index
    %c0_2 = arith.constant 0 : index
    %1 = vector.load %arg2[%c0_1, %c0_2] : memref<128x128xbf16, #tpu.memory_space<vmem>>, vector<128x128xbf16>
    %cst = arith.constant dense<0.000000e+00> : vector<8x128xf32>
    %2 = tpu.matmul %0, %1, %cst {dimension_numbers = #tpu.dot_dimension_numbers<[1], [0], [0], [1], [0, 0, 1, 1], [], []>} : vector<8x128xbf16>, vector<128x128xbf16>, vector<8x128xf32> -> vector<8x128xf32>
    %c0_3 = arith.constant 0 : index
    %c0_4 = arith.constant 0 : index
    %3 = vector.load %arg3[%c0_3, %c0_4] : memref<1x128xf32, #tpu.memory_space<vmem>>, vector<1x128xf32>
    %4 = vector.broadcast %3 : vector<1x128xf32> to vector<8x128xf32>
    %5 = arith.addf %2, %4 : vector<8x128xf32>
    %cst_5 = arith.constant 2.000000e-01 : f32
    %6 = vector.broadcast %cst_5 : f32 to vector<8x128xf32>
    %7 = arith.mulf %6, %5 : vector<8x128xf32>
    %8 = arith.maximumf %5, %7 : vector<8x128xf32>
    %9 = arith.truncf %8 : vector<8x128xf32> to vector<8x128xbf16>
    %c0_6 = arith.constant 0 : index
    %c0_7 = arith.constant 0 : index
    %10 = vector.load %arg4[%c0_6, %c0_7] : memref<128x128xbf16, #tpu.memory_space<vmem>>, vector<128x128xbf16>
    %cst_8 = arith.constant dense<0.000000e+00> : vector<8x128xf32>
    %11 = tpu.matmul %9, %10, %cst_8 {dimension_numbers = #tpu.dot_dimension_numbers<[1], [0], [0], [1], [0, 0, 1, 1], [], []>} : vector<8x128xbf16>, vector<128x128xbf16>, vector<8x128xf32> -> vector<8x128xf32>
    %c0_9 = arith.constant 0 : index
    %c0_10 = arith.constant 0 : index
    %12 = vector.load %arg5[%c0_9, %c0_10] : memref<1x128xf32, #tpu.memory_space<vmem>>, vector<1x128xf32>
    %13 = vector.broadcast %12 : vector<1x128xf32> to vector<8x128xf32>
    %14 = arith.addf %11, %13 : vector<8x128xf32>
    %cst_11 = arith.constant 2.000000e-01 : f32
    %15 = vector.broadcast %cst_11 : f32 to vector<8x128xf32>
    %16 = arith.mulf %15, %14 : vector<8x128xf32>
    %17 = arith.maximumf %14, %16 : vector<8x128xf32>
    %18 = arith.truncf %17 : vector<8x128xf32> to vector<8x128xbf16>
    %c0_12 = arith.constant 0 : index
    %c0_13 = arith.constant 0 : index
    %19 = vector.load %arg6[%c0_12, %c0_13] : memref<128x128xbf16, #tpu.memory_space<vmem>>, vector<128x128xbf16>
    %cst_14 = arith.constant dense<0.000000e+00> : vector<8x128xf32>
    %20 = tpu.matmul %18, %19, %cst_14 {dimension_numbers = #tpu.dot_dimension_numbers<[1], [0], [0], [1], [0, 0, 1, 1], [], []>} : vector<8x128xbf16>, vector<128x128xbf16>, vector<8x128xf32> -> vector<8x128xf32>
    %c0_15 = arith.constant 0 : index
    %c0_16 = arith.constant 0 : index
    %21 = vector.load %arg7[%c0_15, %c0_16] : memref<1x128xf32, #tpu.memory_space<vmem>>, vector<1x128xf32>
    %22 = vector.broadcast %21 : vector<1x128xf32> to vector<8x128xf32>
    %23 = arith.addf %20, %22 : vector<8x128xf32>
    %24 = arith.truncf %23 : vector<8x128xf32> to vector<8x128xbf16>
    %c0_17 = arith.constant 0 : index
    %c0_18 = arith.constant 0 : index
    %25 = vector.load %arg8[%c0_17, %c0_18] : memref<8x128xbf16, #tpu.memory_space<vmem>>, vector<8x128xbf16>
    tpu.vector_store %arg8[%c0_17, %c0_18], %24 {strides = array<i32>} : memref<8x128xbf16, #tpu.memory_space<vmem>>, vector<8x128xbf16>,
    return
  }
  func.func @transform_0(%arg0: i32) -> (i32, i32) {
    %c0_i32 = arith.constant 0 : i32
    %c0_i32_0 = arith.constant 0 : i32
    return %arg0, %c0_i32 : i32, i32
  }
  func.func @transform_1(%arg0: i32) -> (i32, i32) {
    %c0_i32 = arith.constant 0 : i32
    %c0_i32_0 = arith.constant 0 : i32
    %c0_i32_1 = arith.constant 0 : i32
    return %c0_i32, %c0_i32_0 : i32, i32
  }
  func.func @transform_2(%arg0: i32) -> (i32, i32) {
    %c0_i32 = arith.constant 0 : i32
    %c0_i32_0 = arith.constant 0 : i32
    %c0_i32_1 = arith.constant 0 : i32
    return %c0_i32, %c0_i32_0 : i32, i32
  }
  func.func @transform_3(%arg0: i32) -> (i32, i32) {
    %c0_i32 = arith.constant 0 : i32
    %c0_i32_0 = arith.constant 0 : i32
    %c0_i32_1 = arith.constant 0 : i32
    return %c0_i32, %c0_i32_0 : i32, i32
  }
  func.func @transform_4(%arg0: i32) -> (i32, i32) {
    %c0_i32 = arith.constant 0 : i32
    %c0_i32_0 = arith.constant 0 : i32
    %c0_i32_1 = arith.constant 0 : i32
    return %c0_i32, %c0_i32_0 : i32, i32
  }
  func.func @transform_5(%arg0: i32) -> (i32, i32) {
    %c0_i32 = arith.constant 0 : i32
    %c0_i32_0 = arith.constant 0 : i32
    %c0_i32_1 = arith.constant 0 : i32
    return %c0_i32, %c0_i32_0 : i32, i32
  }
  func.func @transform_6(%arg0: i32) -> (i32, i32) {
    %c0_i32 = arith.constant 0 : i32
    %c0_i32_0 = arith.constant 0 : i32
    %c0_i32_1 = arith.constant 0 : i32
    return %c0_i32, %c0_i32_0 : i32, i32
  }
  func.func @transform_7(%arg0: i32) -> (i32, i32) {
    %c0_i32 = arith.constant 0 : i32
    %c0_i32_0 = arith.constant 0 : i32
    return %arg0, %c0_i32 : i32, i32
  }
}

</mosaic_0001>

<llo_original>
// kernel: ann_forward.1
$region0: #{ann_forward.1}
  #allocation0 [shape = 'u32[]', space=smem, size = 0x4, offset = 0x4, fixed_abs, tag = 'smem constant byte address 0x4 - core index']
  #allocation1 [shape = 'u32[144,128]{1,0:T(1,128)}', space=vmem, size = 0x12000, scoped, tag = 'internal scratch']
  %s0 = inlined_call_operand.vmem [shape: bf16[8,128], index: 0, kind: input, shape index: {}]
  %s1 = inlined_call_operand.hbm [shape: bf16[128,128], index: 1, kind: input, shape index: {}]
  %s2 = inlined_call_operand.vmem [shape: f32[1,128], index: 2, kind: input, shape index: {}]
  %s3 = inlined_call_operand.hbm [shape: bf16[128,128], index: 3, kind: input, shape index: {}]
  %s4 = inlined_call_operand.vmem [shape: f32[1,128], index: 4, kind: input, shape index: {}]
  %s5 = inlined_call_operand.hbm [shape: bf16[128,128], index: 5, kind: input, shape index: {}]
  %s6 = inlined_call_operand.vmem [shape: f32[1,128], index: 6, kind: input, shape index: {}]
  %s7 = inlined_call_operand.vmem [shape: bf16[8,128], index: 7, kind: output, shape index: {}]
  %s8 = sld [smem:[#allocation0]]
  $region50: #{ann_forward.1} parent=0
    _
  %s10 = ssub.s32 1, %s8
  %s11 = scalar_select 0, %s10, %s8
  $region1: #{ann_forward.1} parent=0
    #allocation2 [shape = 'u8[32768]{0}', space=vmem, size = 0x8000, scoped, tag = 'input window, operand 1, single buffered']
    #allocation3 [shape = 's32[1]{0}', space=sflag, size = 0x4, scoped, tag = 'scoped memory for ann_forward.1']
    #allocation4 [shape = 'u8[32768]{0}', space=vmem, size = 0x8000, scoped, tag = 'input window, operand 3, single buffered']
    #allocation5 [shape = 's32[1]{0}', space=sflag, size = 0x4, scoped, tag = 'scoped memory for ann_forward.1']
    #allocation6 [shape = 'u8[32768]{0}', space=vmem, size = 0x8000, scoped, tag = 'input window, operand 5, single buffered']
    %12 = vsyncpa [#allocation3], 0
    %13 = vsyncpa [#allocation5], 0
    // Predicated region
    $region2: #{ann_forward.1} parent=1 // pred_check
      _
    $region3: #{ann_forward.1} parent=1 // pred_check_branch
      %15 = sbr.rel (0) target = $region5
    $region4: #{ann_forward.1} parent=1 // pred_region
      _
    $region5: #{ann_forward.1} parent=1 // pred_fallthru
      _
    // Predicated region
    $region6: #{ann_forward.1} parent=1 // pred_check
      _
    $region7: #{ann_forward.1} parent=1 // pred_check_branch
      %17 = sbr.rel (0) target = $region9
    $region8: #{ann_forward.1} parent=1 // pred_region
      %s19 = ssub.s32 1024, 1024
      %20 = vsyncadd [#allocation3], %s19
      %s21 = sshll.u32 [#allocation2], 4
      %s22 = int_to_ptr.vmem [resolvable:$true] %s21
      %27 = dma.hbm_to_vmem [thread:$0]  %s1, 1024, %s22, [#allocation3], 64, 64, 4
    $region9: #{ann_forward.1} parent=1 // pred_fallthru
      _
    // Predicated region
    $region10: #{ann_forward.1} parent=1 // pred_check
      _
    $region11: #{ann_forward.1} parent=1 // pred_check_branch
      %29 = sbr.rel (0) target = $region13
    $region12: #{ann_forward.1} parent=1 // pred_region
      _
    $region13: #{ann_forward.1} parent=1 // pred_fallthru
      _
    // Predicated region
    $region14: #{ann_forward.1} parent=1 // pred_check
      _
    $region15: #{ann_forward.1} parent=1 // pred_check_branch
      %31 = sbr.rel (0) target = $region17
    $region16: #{ann_forward.1} parent=1 // pred_region
      %s33 = ssub.s32 1024, 1024
      %34 = vsyncadd [#allocation5], %s33
      %s35 = sshll.u32 [#allocation4], 4
      %s36 = int_to_ptr.vmem [resolvable:$true] %s35
      %41 = dma.hbm_to_vmem [thread:$0]  %s3, 1024, %s36, [#allocation5], 64, 64, 4
    $region17: #{ann_forward.1} parent=1 // pred_fallthru
      _
    // Predicated region
    $region18: #{ann_forward.1} parent=1 // pred_check
      _
    $region19: #{ann_forward.1} parent=1 // pred_check_branch
      %43 = sbr.rel (0) target = $region21
    $region20: #{ann_forward.1} parent=1 // pred_region
      _
    $region21: #{ann_forward.1} parent=1 // pred_fallthru
      _
    // Predicated region
    $region22: #{ann_forward.1} parent=1 // pred_check
      _
    $region23: #{ann_forward.1} parent=1 // pred_check_branch
      %45 = sbr.rel (0) target = $region25
    $region24: #{ann_forward.1} parent=1 // pred_region
      %s47 = ssub.s32 1024, 1024
      %48 = vsyncadd [#allocation5], %s47
      %s49 = sshll.u32 [#allocation6], 4
      %s50 = int_to_ptr.vmem [resolvable:$true] %s49
      %55 = dma.hbm_to_vmem [thread:$0]  %s5, 1024, %s50, [#allocation5], 64, 64, 4
    $region25: #{ann_forward.1} parent=1 // pred_fallthru
      _
    // Predicated region
    $region26: #{ann_forward.1} parent=1 // pred_check
      _
    $region27: #{ann_forward.1} parent=1 // pred_check_branch
      %57 = sbr.rel (0) target = $region29
    $region28: #{ann_forward.1} parent=1 // pred_region
      _
    $region29: #{ann_forward.1} parent=1 // pred_fallthru
      _
    // Predicated region
    $region30: #{ann_forward.1} parent=1 // pred_check
      _
    $region31: #{ann_forward.1} parent=1 // pred_check_branch
      %59 = sbr.rel (0) target = $region33
    $region32: #{ann_forward.1} parent=1 // pred_region
      %60 = dma.done [#allocation3], 1024
    $region33: #{ann_forward.1} parent=1 // pred_fallthru
      _
    // Predicated region
    $region34: #{ann_forward.1} parent=1 // pred_check
      _
    $region35: #{ann_forward.1} parent=1 // pred_check_branch
      %62 = sbr.rel (0) target = $region37
    $region36: #{ann_forward.1} parent=1 // pred_region
      %63 = dma.done [#allocation5], 1024
    $region37: #{ann_forward.1} parent=1 // pred_fallthru
      _
    // Predicated region
    $region38: #{ann_forward.1} parent=1 // pred_check
      _
    $region39: #{ann_forward.1} parent=1 // pred_check_branch
      %65 = sbr.rel (0) target = $region41
    $region40: #{ann_forward.1} parent=1 // pred_region
      %66 = dma.done [#allocation5], 1024
    $region41: #{ann_forward.1} parent=1 // pred_fallthru
      _
    %v68 = vld [vmem:[%s0] sm:$0xf]
    %v69 = vld [vmem:[#allocation2] sm:$0xf]
    %v70 = vld [vmem:[#allocation2 + $0x4] sm:$0xf]
    %v71 = vld [vmem:[#allocation2 + $0x8] sm:$0xf]
    %v72 = vld [vmem:[#allocation2 + $0xc] sm:$0xf]
    %v73 = vld [vmem:[#allocation2 + $0x10] sm:$0xf]
    %v74 = vld [vmem:[#allocation2 + $0x14] sm:$0xf]
    %v75 = vld [vmem:[#allocation2 + $0x18] sm:$0xf]
    %v76 = vld [vmem:[#allocation2 + $0x1c] sm:$0xf]
    %v77 = vld [vmem:[#allocation2 + $0x20] sm:$0xf]
    %v78 = vld [vmem:[#allocation2 + $0x24] sm:$0xf]
    %v79 = vld [vmem:[#allocation2 + $0x28] sm:$0xf]
    %v80 = vld [vmem:[#allocation2 + $0x2c] sm:$0xf]
    %v81 = vld [vmem:[#allocation2 + $0x30] sm:$0xf]
    %v82 = vld [vmem:[#allocation2 + $0x34] sm:$0xf]
    %v83 = vld [vmem:[#allocation2 + $0x38] sm:$0xf]
    %v84 = vld [vmem:[#allocation2 + $0x3c] sm:$0xf]
    %v85 = vld [vmem:[%s2] sm:$0x1]
    %v87 = vlaneseq
    %v88 = vshrl.u32 %v87, 7
    %v89 = vsub.s32 0, %v88
    %v90 = vrot.slane %v85, %v89
    %v108 = vunpack.c.l.b16 %v69
    %v109 = vunpack.c.l.b16 %v70
    %v110 = vunpack.c.l.b16 %v71
    %v111 = vunpack.c.l.b16 %v72
    %v112 = vunpack.c.l.b16 %v73
    %v113 = vunpack.c.l.b16 %v74
    %v114 = vunpack.c.l.b16 %v75
    %v115 = vunpack.c.l.b16 %v76
    %v116 = vunpack.c.l.b16 %v77
    %v117 = vunpack.c.l.b16 %v78
    %v118 = vunpack.c.l.b16 %v79
    %v119 = vunpack.c.l.b16 %v80
    %v120 = vunpack.c.l.b16 %v81
    %v121 = vunpack.c.l.b16 %v82
    %v122 = vunpack.c.l.b16 %v83
    %v123 = vunpack.c.l.b16 %v84
    %v124 = vpack.c.b16 %v109, %v108
    %v125 = vpack.c.b16 %v111, %v110
    %v126 = vpack.c.b16 %v113, %v112
    %v127 = vpack.c.b16 %v115, %v114
    %v128 = vpack.c.b16 %v117, %v116
    %v129 = vpack.c.b16 %v119, %v118
    %v130 = vpack.c.b16 %v121, %v120
    %v131 = vpack.c.b16 %v123, %v122
    %140 = vmatprep.subr.bf16.mxu0 0
    %141 = vmatpush1.bf16.msra.mxu0 %v131
    %142 = vmatprep.subr.bf16.mxu0 0
    %143 = vmatpush1.bf16.msra.mxu0 %v130
    %144 = vmatprep.subr.bf16.mxu0 0
    %145 = vmatpush1.bf16.msra.mxu0 %v129
    %146 = vmatprep.subr.bf16.mxu0 0
    %147 = vmatpush1.bf16.msra.mxu0 %v128
    %148 = vmatprep.subr.bf16.mxu0 0
    %149 = vmatpush1.bf16.msra.mxu0 %v127
    %150 = vmatprep.subr.bf16.mxu0 0
    %151 = vmatpush1.bf16.msra.mxu0 %v126
    %152 = vmatprep.subr.bf16.mxu0 0
    %153 = vmatpush1.bf16.msra.mxu0 %v125
    %154 = vmatprep.subr.bf16.mxu0 0
    %155 = vmatpush1.bf16.msra.mxu0 %v124
    %156 = vmatprep.subr.bf16.mxu0 0
    %157 = vmatpush2.bf16.msra.mxu0 0
    %158 = vmatprep.subr.bf16.mxu0 0
    %159 = vmatpush2.bf16.msra.mxu0 0
    %160 = vmatprep.subr.bf16.mxu0 0
    %161 = vmatpush2.bf16.msra.mxu0 0
    %162 = vmatprep.subr.bf16.mxu0 0
    %163 = vmatpush2.bf16.msra.mxu0 0
    %164 = vmatprep.subr.bf16.mxu0 0
    %165 = vmatpush2.bf16.msra.mxu0 0
    %166 = vmatprep.subr.bf16.mxu0 0
    %167 = vmatpush2.bf16.msra.mxu0 0
    %168 = vmatprep.subr.bf16.mxu0 0
    %169 = vmatpush2.bf16.msra.mxu0 0
    %170 = vmatprep.subr.bf16.mxu0 0
    %171 = vmatpush2.bf16.msra.mxu0 0
    %172 = vmatprep.mubr.bf16.mxu0 0
    %173 = vmatmul.mubr.bf16.gmra.mxu0 %v68
    %v174 = vpop.f32.mrf.mxu0
    %v175 = vadd.f32 %v90, %v174
    %v176 = vpop.f32.mrf.mxu0
    %v177 = vpop.f32.mrf.mxu0
    %v178 = vpop.f32.mrf.mxu0
    %179 = vdwg.mxu0
    %v180 = vmul.f32 %v175, 0.2
    %v181 = vmax.f32 %v175, %v180
    %v182 = vpack.c.bf16 %v181, %v181
    %v183 = vld [vmem:[#allocation4] sm:$0xf]
    %v184 = vld [vmem:[#allocation4 + $0x4] sm:$0xf]
    %v185 = vld [vmem:[#allocation4 + $0x8] sm:$0xf]
    %v186 = vld [vmem:[#allocation4 + $0xc] sm:$0xf]
    %v187 = vld [vmem:[#allocation4 + $0x10] sm:$0xf]
    %v188 = vld [vmem:[#allocation4 + $0x14] sm:$0xf]
    %v189 = vld [vmem:[#allocation4 + $0x18] sm:$0xf]
    %v190 = vld [vmem:[#allocation4 + $0x1c] sm:$0xf]
    %v191 = vld [vmem:[#allocation4 + $0x20] sm:$0xf]
    %v192 = vld [vmem:[#allocation4 + $0x24] sm:$0xf]
    %v193 = vld [vmem:[#allocation4 + $0x28] sm:$0xf]
    %v194 = vld [vmem:[#allocation4 + $0x2c] sm:$0xf]
    %v195 = vld [vmem:[#allocation4 + $0x30] sm:$0xf]
    %v196 = vld [vmem:[#allocation4 + $0x34] sm:$0xf]
    %v197 = vld [vmem:[#allocation4 + $0x38] sm:$0xf]
    %v198 = vld [vmem:[#allocation4 + $0x3c] sm:$0xf]
    %v199 = vld [vmem:[%s4] sm:$0x1]
    %v201 = vlaneseq
    %v202 = vshrl.u32 %v201, 7
    %v203 = vsub.s32 0, %v202
    %v204 = vrot.slane %v199, %v203
    %v222 = vunpack.c.l.b16 %v183
    %v223 = vunpack.c.l.b16 %v184
    %v224 = vunpack.c.l.b16 %v185
    %v225 = vunpack.c.l.b16 %v186
    %v226 = vunpack.c.l.b16 %v187
    %v227 = vunpack.c.l.b16 %v188
    %v228 = vunpack.c.l.b16 %v189
    %v229 = vunpack.c.l.b16 %v190
    %v230 = vunpack.c.l.b16 %v191
    %v231 = vunpack.c.l.b16 %v192
    %v232 = vunpack.c.l.b16 %v193
    %v233 = vunpack.c.l.b16 %v194
    %v234 = vunpack.c.l.b16 %v195
    %v235 = vunpack.c.l.b16 %v196
    %v236 = vunpack.c.l.b16 %v197
    %v237 = vunpack.c.l.b16 %v198
    %v238 = vpack.c.b16 %v223, %v222
    %v239 = vpack.c.b16 %v225, %v224
    %v240 = vpack.c.b16 %v227, %v226
    %v241 = vpack.c.b16 %v229, %v228
    %v242 = vpack.c.b16 %v231, %v230
    %v243 = vpack.c.b16 %v233, %v232
    %v244 = vpack.c.b16 %v235, %v234
    %v245 = vpack.c.b16 %v237, %v236
    %254 = vmatprep.subr.bf16.mxu0 0
    %255 = vmatpush1.bf16.msra.mxu0 %v245
    %256 = vmatprep.subr.bf16.mxu0 0
    %257 = vmatpush1.bf16.msra.mxu0 %v244
    %258 = vmatprep.subr.bf16.mxu0 0
    %259 = vmatpush1.bf16.msra.mxu0 %v243
    %260 = vmatprep.subr.bf16.mxu0 0
    %261 = vmatpush1.bf16.msra.mxu0 %v242
    %262 = vmatprep.subr.bf16.mxu0 0
    %263 = vmatpush1.bf16.msra.mxu0 %v241
    %264 = vmatprep.subr.bf16.mxu0 0
    %265 = vmatpush1.bf16.msra.mxu0 %v240
    %266 = vmatprep.subr.bf16.mxu0 0
    %267 = vmatpush1.bf16.msra.mxu0 %v239
    %268 = vmatprep.subr.bf16.mxu0 0
    %269 = vmatpush1.bf16.msra.mxu0 %v238
    %270 = vmatprep.subr.bf16.mxu0 0
    %271 = vmatpush2.bf16.msra.mxu0 0
    %272 = vmatprep.subr.bf16.mxu0 0
    %273 = vmatpush2.bf16.msra.mxu0 0
    %274 = vmatprep.subr.bf16.mxu0 0
    %275 = vmatpush2.bf16.msra.mxu0 0
    %276 = vmatprep.subr.bf16.mxu0 0
    %277 = vmatpush2.bf16.msra.mxu0 0
    %278 = vmatprep.subr.bf16.mxu0 0
    %279 = vmatpush2.bf16.msra.mxu0 0
    %280 = vmatprep.subr.bf16.mxu0 0
    %281 = vmatpush2.bf16.msra.mxu0 0
    %282 = vmatprep.subr.bf16.mxu0 0
    %283 = vmatpush2.bf16.msra.mxu0 0
    %284 = vmatprep.subr.bf16.mxu0 0
    %285 = vmatpush2.bf16.msra.mxu0 0
    %286 = vmatprep.mubr.bf16.mxu0 0
    %287 = vmatmul.mubr.bf16.gmra.mxu0 %v182
    %v288 = vpop.f32.mrf.mxu0
    %v289 = vadd.f32 %v204, %v288
    %v290 = vpop.f32.mrf.mxu0
    %v291 = vpop.f32.mrf.mxu0
    %v292 = vpop.f32.mrf.mxu0
    %293 = vdwg.mxu0
    %v294 = vmul.f32 %v289, 0.2
    %v295 = vmax.f32 %v289, %v294
    %v296 = vpack.c.bf16 %v295, %v295
    %v297 = vld [vmem:[#allocation6] sm:$0xf]
    %v298 = vld [vmem:[#allocation6 + $0x4] sm:$0xf]
    %v299 = vld [vmem:[#allocation6 + $0x8] sm:$0xf]
    %v300 = vld [vmem:[#allocation6 + $0xc] sm:$0xf]
    %v301 = vld [vmem:[#allocation6 + $0x10] sm:$0xf]
    %v302 = vld [vmem:[#allocation6 + $0x14] sm:$0xf]
    %v303 = vld [vmem:[#allocation6 + $0x18] sm:$0xf]
    %v304 = vld [vmem:[#allocation6 + $0x1c] sm:$0xf]
    %v305 = vld [vmem:[#allocation6 + $0x20] sm:$0xf]
    %v306 = vld [vmem:[#allocation6 + $0x24] sm:$0xf]
    %v307 = vld [vmem:[#allocation6 + $0x28] sm:$0xf]
    %v308 = vld [vmem:[#allocation6 + $0x2c] sm:$0xf]
    %v309 = vld [vmem:[#allocation6 + $0x30] sm:$0xf]
    %v310 = vld [vmem:[#allocation6 + $0x34] sm:$0xf]
    %v311 = vld [vmem:[#allocation6 + $0x38] sm:$0xf]
    %v312 = vld [vmem:[#allocation6 + $0x3c] sm:$0xf]
    %v313 = vld [vmem:[%s6] sm:$0x1]
    %v315 = vlaneseq
    %v316 = vshrl.u32 %v315, 7
    %v317 = vsub.s32 0, %v316
    %v318 = vrot.slane %v313, %v317
    %v336 = vunpack.c.l.b16 %v297
    %v337 = vunpack.c.l.b16 %v298
    %v338 = vunpack.c.l.b16 %v299
    %v339 = vunpack.c.l.b16 %v300
    %v340 = vunpack.c.l.b16 %v301
    %v341 = vunpack.c.l.b16 %v302
    %v342 = vunpack.c.l.b16 %v303
    %v343 = vunpack.c.l.b16 %v304
    %v344 = vunpack.c.l.b16 %v305
    %v345 = vunpack.c.l.b16 %v306
    %v346 = vunpack.c.l.b16 %v307
    %v347 = vunpack.c.l.b16 %v308
    %v348 = vunpack.c.l.b16 %v309
    %v349 = vunpack.c.l.b16 %v310
    %v350 = vunpack.c.l.b16 %v311
    %v351 = vunpack.c.l.b16 %v312
    %v352 = vpack.c.b16 %v337, %v336
    %v353 = vpack.c.b16 %v339, %v338
    %v354 = vpack.c.b16 %v341, %v340
    %v355 = vpack.c.b16 %v343, %v342
    %v356 = vpack.c.b16 %v345, %v344
    %v357 = vpack.c.b16 %v347, %v346
    %v358 = vpack.c.b16 %v349, %v348
    %v359 = vpack.c.b16 %v351, %v350
    %368 = vmatprep.subr.bf16.mxu0 0
    %369 = vmatpush1.bf16.msra.mxu0 %v359
    %370 = vmatprep.subr.bf16.mxu0 0
    %371 = vmatpush1.bf16.msra.mxu0 %v358
    %372 = vmatprep.subr.bf16.mxu0 0
    %373 = vmatpush1.bf16.msra.mxu0 %v357
    %374 = vmatprep.subr.bf16.mxu0 0
    %375 = vmatpush1.bf16.msra.mxu0 %v356
    %376 = vmatprep.subr.bf16.mxu0 0
    %377 = vmatpush1.bf16.msra.mxu0 %v355
    %378 = vmatprep.subr.bf16.mxu0 0
    %379 = vmatpush1.bf16.msra.mxu0 %v354
    %380 = vmatprep.subr.bf16.mxu0 0
    %381 = vmatpush1.bf16.msra.mxu0 %v353
    %382 = vmatprep.subr.bf16.mxu0 0
    %383 = vmatpush1.bf16.msra.mxu0 %v352
    %384 = vmatprep.subr.bf16.mxu0 0
    %385 = vmatpush2.bf16.msra.mxu0 0
    %386 = vmatprep.subr.bf16.mxu0 0
    %387 = vmatpush2.bf16.msra.mxu0 0
    %388 = vmatprep.subr.bf16.mxu0 0
    %389 = vmatpush2.bf16.msra.mxu0 0
    %390 = vmatprep.subr.bf16.mxu0 0
    %391 = vmatpush2.bf16.msra.mxu0 0
    %392 = vmatprep.subr.bf16.mxu0 0
    %393 = vmatpush2.bf16.msra.mxu0 0
    %394 = vmatprep.subr.bf16.mxu0 0
    %395 = vmatpush2.bf16.msra.mxu0 0
    %396 = vmatprep.subr.bf16.mxu0 0
    %397 = vmatpush2.bf16.msra.mxu0 0
    %398 = vmatprep.subr.bf16.mxu0 0
    %399 = vmatpush2.bf16.msra.mxu0 0
    %400 = vmatprep.mubr.bf16.mxu0 0
    %401 = vmatmul.mubr.bf16.gmra.mxu0 %v296
    %v402 = vpop.f32.mrf.mxu0
    %v403 = vadd.f32 %v318, %v402
    %v404 = vpop.f32.mrf.mxu0
    %v405 = vpop.f32.mrf.mxu0
    %v406 = vpop.f32.mrf.mxu0
    %407 = vdwg.mxu0
    %v408 = vpack.c.bf16 %v403, %v403
    %409 = vst [vmem:[%s7] sm:$0xf] %v408
    // Predicated region
    $region42: #{ann_forward.1} parent=1 // pred_check
      _
    $region43: #{ann_forward.1} parent=1 // pred_check_branch
      %411 = sbr.rel (0) target = $region45
    $region44: #{ann_forward.1} parent=1 // pred_region
      _
    $region45: #{ann_forward.1} parent=1 // pred_fallthru
      _
    // Predicated region
    $region46: #{ann_forward.1} parent=1 // pred_check
      _
    $region47: #{ann_forward.1} parent=1 // pred_check_branch
      %413 = sbr.rel (0) target = $region49
    $region48: #{ann_forward.1} parent=1 // pred_region
      _
    $region49: #{ann_forward.1} parent=1 // pred_fallthru
      _
    %414 = vsyncpa [#allocation3], 1
    %415 = vsyncpa [#allocation5], 1

</llo_original>
